<compile_context>
chip_gen: v7x
topology: tpu7x:2x2x1
jax: 0.10.0
libtpu: 0.0.40
codegen_flags: <defaults>
</compile_context>

<pallas_src>
import jax
import jax.numpy as jnp
from jax.experimental import pallas as pl
from jax.experimental.pallas import tpu as pltpu


def se_block_kernel(x_ref, w1_ref, w2_ref, o_ref):
    # x_ref: (TILE_B, CP); w1_ref: (CP, CRP); w2_ref: (CRP, CP); o_ref: (TILE_B, CP)
    x = x_ref[...]  # native dtype; MXU accumulates in f32 below.

    # AdaptiveAvgPool1d(1) over a length-1 axis is the identity -> "squeeze" is x itself.

    # fc[0]: Linear(C -> C_red, bias=False) + ReLU
    # (weights pre-transposed + block-diagonalised in the wrapper).
    h = jnp.dot(x, w1_ref[...], preferred_element_type=jnp.float32)
    h = jnp.maximum(h, 0.0)

    # fc[2]: Linear(C_red -> C, bias=False) + Sigmoid.
    # NOTE: if weights are bf16 this downcast drops the f32 accumulation of the
    # first matmul; acceptable for SE gating.
    s = jnp.dot(h.astype(w2_ref.dtype), w2_ref[...],
                preferred_element_type=jnp.float32)
    # sigmoid(s) = 1 / (1 + exp(-s)); exp and the approx reciprocal both land on
    # the EUP slot, keeping them free under the DMA-bound regime.
    s = pl.reciprocal(1.0 + jnp.exp(-s), approx=True)

    # Channel-wise rescale of the input; epilogue in x's native dtype.
    o_ref[...] = (x * s.astype(x.dtype)).astype(o_ref.dtype)


def _round_up(v, m):
    return ((v + m - 1) // m) * m


def se_block(x, w1, w2, *, tile_b=None):
    """x: (B, C); w1: (C//r, C); w2: (C, C//r)  -- PyTorch Linear (out, in) layout."""
    b, c = x.shape
    c_red = w1.shape[0]

    # ---- Lane-dense packing: put `pack` batch rows in one 128-lane row. ----
    pack = 1
    if c < 128 and 128 % c == 0 and b % (128 // c) == 0:
        pack = 128 // c
    bp = b // pack          # packed batch rows
    cp = c * pack           # packed channel width (multiple of 128 when pack > 1)
    crp = c_red * pack

    x_p = x.reshape(bp, cp)

    # Transpose once at the API boundary so the kernel never transposes, then
    # block-diagonalise so packed rows stay independent: kron(I, W) = blockdiag(W,...,W).
    w1t = w1.T  # (C, C_red)
    w2t = w2.T  # (C_red, C)
    eye = jnp.eye(pack, dtype=w1t.dtype)
    w1_bd = jnp.kron(eye, w1t)  # (cp, crp)
    w2_bd = jnp.kron(eye, w2t)  # (crp, cp)

    # ---- Batch tiling. ----
    if tile_b is None:
        row_bytes = cp * jnp.dtype(x.dtype).itemsize
        # ~4 MiB per x/out buffer; double-buffered x + out ~= 16 MiB total,
        # safely under the 32 MiB scoped-VMEM default (and fine on v7x's 64 MiB).
        target = max(8, (4 * 1024 * 1024) // max(row_bytes, 1))
        target = (target // 8) * 8
        if bp <= 8:
            tile_b = bp  # single full block for tiny inputs (full-dim block is legal)
        else:
            # Aim for >=2 grid steps so ("parallel",) shards across both v7x TCs;
            # keep the sublane dimension a multiple of 8.
            half = _round_up(pl.cdiv(bp, 2), 8)
            tile_b = min(target, half)
    grid = (pl.cdiv(bp, tile_b),)

    x_bytes = jnp.dtype(x.dtype).itemsize
    w_bytes = jnp.dtype(w1.dtype).itemsize
    cost = pl.CostEstimate(
        flops=4 * bp * cp * crp,                    # two (block-diagonal) matmuls
        transcendentals=bp * cp,                    # exp (+ approx reciprocal)
        bytes_accessed=2 * b * c * x_bytes + 2 * cp * crp * w_bytes,
    )

    out_p = pl.pallas_call(
        se_block_kernel,
        out_shape=jax.ShapeDtypeStruct((bp, cp), x.dtype),
        grid=grid,
        in_specs=[
            pl.BlockSpec((tile_b, cp), lambda i: (i, 0)),
            pl.BlockSpec((cp, crp), lambda i: (0, 0)),   # weights stay VMEM-resident
            pl.BlockSpec((crp, cp), lambda i: (0, 0)),
        ],
        out_specs=pl.BlockSpec((tile_b, cp), lambda i: (i, 0)),
        compiler_params=pltpu.CompilerParams(
            dimension_semantics=("parallel",)),
        cost_estimate=cost,
    )(x_p, w1_bd, w2_bd)

    return out_p.reshape(b, c)


if __name__ == "__main__":
    # Small shapes consistent with the module: batch=8, channel=64, reduction=16.
    B, C, R = 8, 64, 16
    C_red = C // R

    key = jax.random.PRNGKey(0)
    kx, k1, k2 = jax.random.split(key, 3)

    x = jax.random.normal(kx, (B, C), dtype=jnp.float32)
    # Deterministic synthetic weights in PyTorch Linear layout (out, in).
    w1 = jax.random.normal(k1, (C_red, C), dtype=jnp.float32) * 0.1
    w2 = jax.random.normal(k2, (C, C_red), dtype=jnp.float32) * 0.1

    out = jax.block_until_ready(se_block(x, w1, w2))

    # Pure-JAX reference (exact sigmoid; kernel uses EUP approx reciprocal).
    ref_y = jax.nn.sigmoid(jnp.maximum(x @ w1.T, 0.0) @ w2.T)
    ref = x * ref_y
    assert out.shape == ref.shape
    assert jnp.allclose(out, ref, atol=2e-3, rtol=2e-3), "mismatch vs reference"

    print("KERNEL_OK")
</pallas_src>

<mosaic_0001>
module attributes {stable_mosaic.version = 11 : i64} {
  func.func @se_block_kernel(%arg0: i32, %arg1: memref<4x128xf32, #tpu.memory_space<vmem>>, %arg2: memref<128x8xf32, #tpu.memory_space<vmem>>, %arg3: memref<8x128xf32, #tpu.memory_space<vmem>>, %arg4: memref<4x128xf32, #tpu.memory_space<vmem>>) attributes {dimension_semantics = [#tpu.dimension_semantics<parallel>], iteration_bounds = array<i64: 1>, scalar_prefetch = 0 : i64, scratch_operands = 0 : i64, tpu.core_type = #tpu.core_type<tc>, window_params = [{transform_indices = @transform_0, window_bounds = array<i64: 4, 128>}, {pipeline_mode = #tpu.pipeline_mode<synchronous>, transform_indices = @transform_1, window_bounds = array<i64: 128, 8>}, {pipeline_mode = #tpu.pipeline_mode<synchronous>, transform_indices = @transform_2, window_bounds = array<i64: 8, 128>}, {transform_indices = @transform_3, window_bounds = array<i64: 4, 128>}]} {
    %c0 = arith.constant 0 : index
    %c0_0 = arith.constant 0 : index
    %0 = vector.load %arg1[%c0, %c0_0] : memref<4x128xf32, #tpu.memory_space<vmem>>, vector<4x128xf32>
    %c0_1 = arith.constant 0 : index
    %c0_2 = arith.constant 0 : index
    %1 = vector.load %arg2[%c0_1, %c0_2] : memref<128x8xf32, #tpu.memory_space<vmem>>, vector<128x8xf32>
    %cst = arith.constant dense<0.000000e+00> : vector<4x8xf32>
    %2 = tpu.matmul %0, %1, %cst {dimension_numbers = #tpu.dot_dimension_numbers<[1], [0], [0], [1], [0, 0, 1, 1], [], []>} : vector<4x128xf32>, vector<128x8xf32>, vector<4x8xf32> -> vector<4x8xf32>
    %cst_3 = arith.constant 0.000000e+00 : f32
    %3 = vector.broadcast %cst_3 : f32 to vector<4x8xf32>
    %4 = arith.maximumf %2, %3 : vector<4x8xf32>
    %c0_4 = arith.constant 0 : index
    %c0_5 = arith.constant 0 : index
    %5 = vector.load %arg3[%c0_4, %c0_5] : memref<8x128xf32, #tpu.memory_space<vmem>>, vector<8x128xf32>
    %cst_6 = arith.constant dense<0.000000e+00> : vector<4x128xf32>
    %6 = tpu.matmul %4, %5, %cst_6 {dimension_numbers = #tpu.dot_dimension_numbers<[1], [0], [0], [1], [0, 0, 1, 1], [], []>} : vector<4x8xf32>, vector<8x128xf32>, vector<4x128xf32> -> vector<4x128xf32>
    %cst_7 = arith.constant 0.000000e+00 : f32
    %7 = vector.broadcast %cst_7 : f32 to vector<4x128xf32>
    %8 = arith.subf %7, %6 : vector<4x128xf32>
    %9 = math.exp %8 : vector<4x128xf32>
    %cst_8 = arith.constant 1.000000e+00 : f32
    %10 = vector.broadcast %cst_8 : f32 to vector<4x128xf32>
    %11 = arith.addf %10, %9 : vector<4x128xf32>
    %12 = tpu.reciprocal %11 {approx = true} : vector<4x128xf32> -> vector<4x128xf32>
    %13 = arith.mulf %0, %12 : vector<4x128xf32>
    %c0_9 = arith.constant 0 : index
    %c0_10 = arith.constant 0 : index
    %14 = vector.load %arg4[%c0_9, %c0_10] : memref<4x128xf32, #tpu.memory_space<vmem>>, vector<4x128xf32>
    tpu.vector_store %arg4[%c0_9, %c0_10], %13 {strides = array<i32>} : memref<4x128xf32, #tpu.memory_space<vmem>>, vector<4x128xf32>,
    return
  }
  func.func @transform_0(%arg0: i32) -> (i32, i32) {
    %c0_i32 = arith.constant 0 : i32
    %c0_i32_0 = arith.constant 0 : i32
    return %arg0, %c0_i32 : i32, i32
  }
  func.func @transform_1(%arg0: i32) -> (i32, i32) {
    %c0_i32 = arith.constant 0 : i32
    %c0_i32_0 = arith.constant 0 : i32
    %c0_i32_1 = arith.constant 0 : i32
    return %c0_i32, %c0_i32_0 : i32, i32
  }
  func.func @transform_2(%arg0: i32) -> (i32, i32) {
    %c0_i32 = arith.constant 0 : i32
    %c0_i32_0 = arith.constant 0 : i32
    %c0_i32_1 = arith.constant 0 : i32
    return %c0_i32, %c0_i32_0 : i32, i32
  }
  func.func @transform_3(%arg0: i32) -> (i32, i32) {
    %c0_i32 = arith.constant 0 : i32
    %c0_i32_0 = arith.constant 0 : i32
    return %arg0, %c0_i32 : i32, i32
  }
}

</mosaic_0001>

<llo_original>
// kernel: tpu_custom_call.1
$region0: #{tpu_custom_call.1}
  #allocation0 [shape = 'u32[]', space=smem, size = 0x4, offset = 0x4, fixed_abs, tag = 'smem constant byte address 0x4 - core index']
  #allocation1 [shape = 'u32[144,128]{1,0:T(1,128)}', space=vmem, size = 0x12000, scoped, tag = 'internal scratch']
  %s0 = inlined_call_operand.vmem [shape: f32[4,128], index: 0, kind: input, shape index: {}]
  %s1 = inlined_call_operand.vmem [shape: f32[128,8], index: 1, kind: input, shape index: {}]
  %s2 = inlined_call_operand.vmem [shape: f32[8,128], index: 2, kind: input, shape index: {}]
  %s3 = inlined_call_operand.hbm [shape: f32[4,128], index: 3, kind: output, shape index: {}]
  %s4 = sld [smem:[#allocation0]]
  $region22: #{tpu_custom_call.1} parent=0
    _
  %s6 = ssub.s32 1, %s4
  %s7 = scalar_select 0, %s6, %s4
  $region1: #{tpu_custom_call.1} parent=0
    #allocation2 [shape = 'u8[2048]{0}', space=vmem, size = 0x800, scoped, tag = 'output window, operand 0, single buffered']
    #allocation3 [shape = 's32[1]{0}', space=sflag, size = 0x4, scoped, tag = 'scoped memory for tpu_custom_call.1']
    %8 = vsyncpa [#allocation3], 0
    // Predicated region
    $region2: #{tpu_custom_call.1} parent=1 // pred_check
      _
    $region3: #{tpu_custom_call.1} parent=1 // pred_check_branch
      %10 = sbr.rel (0) target = $region5
    $region4: #{tpu_custom_call.1} parent=1 // pred_region
      _
    $region5: #{tpu_custom_call.1} parent=1 // pred_fallthru
      _
    // Predicated region
    $region6: #{tpu_custom_call.1} parent=1 // pred_check
      _
    $region7: #{tpu_custom_call.1} parent=1 // pred_check_branch
      %12 = sbr.rel (0) target = $region9
    $region8: #{tpu_custom_call.1} parent=1 // pred_region
      _
    $region9: #{tpu_custom_call.1} parent=1 // pred_fallthru
      _
    // Predicated region
    $region10: #{tpu_custom_call.1} parent=1 // pred_check
      _
    $region11: #{tpu_custom_call.1} parent=1 // pred_check_branch
      %14 = sbr.rel (0) target = $region13
    $region12: #{tpu_custom_call.1} parent=1 // pred_region
      _
    $region13: #{tpu_custom_call.1} parent=1 // pred_fallthru
      _
    %v15 = vld [vmem:[%s0] sm:$0xf]
    %v16 = vld [vmem:[%s1] sm:$0xff]
    %v17 = vld [vmem:[%s1 + $0x8] sm:$0xff]
    %v18 = vld [vmem:[%s1 + $0x10] sm:$0xff]
    %v19 = vld [vmem:[%s1 + $0x18] sm:$0xff]
    %v20 = vld [vmem:[%s1 + $0x20] sm:$0xff]
    %v21 = vld [vmem:[%s1 + $0x28] sm:$0xff]
    %v22 = vld [vmem:[%s1 + $0x30] sm:$0xff]
    %v23 = vld [vmem:[%s1 + $0x38] sm:$0xff]
    %v24 = vld [vmem:[%s1 + $0x40] sm:$0xff]
    %v25 = vld [vmem:[%s1 + $0x48] sm:$0xff]
    %v26 = vld [vmem:[%s1 + $0x50] sm:$0xff]
    %v27 = vld [vmem:[%s1 + $0x58] sm:$0xff]
    %v28 = vld [vmem:[%s1 + $0x60] sm:$0xff]
    %v29 = vld [vmem:[%s1 + $0x68] sm:$0xff]
    %v30 = vld [vmem:[%s1 + $0x70] sm:$0xff]
    %v31 = vld [vmem:[%s1 + $0x78] sm:$0xff]
    %32 = vmatprep.subr.mxu0 0.0
    %33 = vmatpush1.msra.mxu0 %v16
    %34 = vmatprep.subr.mxu0 0.0
    %35 = vmatpush1.msra.mxu0 %v17
    %36 = vmatprep.subr.mxu0 0.0
    %37 = vmatpush1.msra.mxu0 %v18
    %38 = vmatprep.subr.mxu0 0.0
    %39 = vmatpush1.msra.mxu0 %v19
    %40 = vmatprep.subr.mxu0 0.0
    %41 = vmatpush1.msra.mxu0 %v20
    %42 = vmatprep.subr.mxu0 0.0
    %43 = vmatpush1.msra.mxu0 %v21
    %44 = vmatprep.subr.mxu0 0.0
    %45 = vmatpush1.msra.mxu0 %v22
    %46 = vmatprep.subr.mxu0 0.0
    %47 = vmatpush1.msra.mxu0 %v23
    %48 = vmatprep.subr.mxu0 0.0
    %49 = vmatpush1.msra.mxu0 %v24
    %50 = vmatprep.subr.mxu0 0.0
    %51 = vmatpush1.msra.mxu0 %v25
    %52 = vmatprep.subr.mxu0 0.0
    %53 = vmatpush1.msra.mxu0 %v26
    %54 = vmatprep.subr.mxu0 0.0
    %55 = vmatpush1.msra.mxu0 %v27
    %56 = vmatprep.subr.mxu0 0.0
    %57 = vmatpush1.msra.mxu0 %v28
    %58 = vmatprep.subr.mxu0 0.0
    %59 = vmatpush1.msra.mxu0 %v29
    %60 = vmatprep.subr.mxu0 0.0
    %61 = vmatpush1.msra.mxu0 %v30
    %62 = vmatprep.subr.mxu0 0.0
    %63 = vmatpush1.msra.mxu0 %v31
    %64 = vmatprep.subr.mxu0 0.0
    %65 = vmatpush1.msra.mxu0 0.0
    %66 = vmatprep.subr.mxu0 0.0
    %67 = vmatpush1.msra.mxu0 0.0
    %68 = vmatprep.subr.mxu0 0.0
    %69 = vmatpush1.msra.mxu0 0.0
    %70 = vmatprep.subr.mxu0 0.0
    %71 = vmatpush1.msra.mxu0 0.0
    %72 = vmatprep.subr.mxu0 0.0
    %73 = vmatpush1.msra.mxu0 0.0
    %74 = vmatprep.subr.mxu0 0.0
    %75 = vmatpush1.msra.mxu0 0.0
    %76 = vmatprep.subr.mxu0 0.0
    %77 = vmatpush1.msra.mxu0 0.0
    %78 = vmatprep.subr.mxu0 0.0
    %79 = vmatpush1.msra.mxu0 0.0
    %80 = vmatprep.subr.mxu0 0.0
    %81 = vmatpush1.msra.mxu0 0.0
    %82 = vmatprep.subr.mxu0 0.0
    %83 = vmatpush1.msra.mxu0 0.0
    %84 = vmatprep.subr.mxu0 0.0
    %85 = vmatpush1.msra.mxu0 0.0
    %86 = vmatprep.subr.mxu0 0.0
    %87 = vmatpush1.msra.mxu0 0.0
    %88 = vmatprep.subr.mxu0 0.0
    %89 = vmatpush1.msra.mxu0 0.0
    %90 = vmatprep.subr.mxu0 0.0
    %91 = vmatpush1.msra.mxu0 0.0
    %92 = vmatprep.subr.mxu0 0.0
    %93 = vmatpush1.msra.mxu0 0.0
    %94 = vmatprep.subr.mxu0 0.0
    %95 = vmatpush1.msra.mxu0 0.0
    %96 = vmatprep.mubr.f32.mxu0 0.0
    %97 = vmatmul.mubr.f32.gmra.mrb[0].mxu0 %v15
    %v98 = vpop.f32.mrb[0].mxu0
    %v99 = vadd.f32 0.0, %v98
    %v100 = vpop.f32.mrb[0].mxu0
    %101 = vdwg.mxu0
    %v102 = vmax.f32 %v99, 0.0
    %v103 = vld [vmem:[%s2] sm:$0xff]
    %vm104 = vcmask 64512
    %v106 = vsel %vm104, %v102, 0
    %108 = vmatprep.subr.mxu0 0.0
    %109 = vmatpush1.msra.mxu0 %v103
    %110 = vmatprep.subr.mxu0 0.0
    %111 = vmatpush1.msra.mxu0 0.0
    %112 = vmatprep.subr.mxu0 0.0
    %113 = vmatpush1.msra.mxu0 0.0
    %114 = vmatprep.subr.mxu0 0.0
    %115 = vmatpush1.msra.mxu0 0.0
    %116 = vmatprep.subr.mxu0 0.0
    %117 = vmatpush1.msra.mxu0 0.0
    %118 = vmatprep.subr.mxu0 0.0
    %119 = vmatpush1.msra.mxu0 0.0
    %120 = vmatprep.subr.mxu0 0.0
    %121 = vmatpush1.msra.mxu0 0.0
    %122 = vmatprep.subr.mxu0 0.0
    %123 = vmatpush1.msra.mxu0 0.0
    %124 = vmatprep.subr.mxu0 0.0
    %125 = vmatpush1.msra.mxu0 0.0
    %126 = vmatprep.subr.mxu0 0.0
    %127 = vmatpush1.msra.mxu0 0.0
    %128 = vmatprep.subr.mxu0 0.0
    %129 = vmatpush1.msra.mxu0 0.0
    %130 = vmatprep.subr.mxu0 0.0
    %131 = vmatpush1.msra.mxu0 0.0
    %132 = vmatprep.subr.mxu0 0.0
    %133 = vmatpush1.msra.mxu0 0.0
    %134 = vmatprep.subr.mxu0 0.0
    %135 = vmatpush1.msra.mxu0 0.0
    %136 = vmatprep.subr.mxu0 0.0
    %137 = vmatpush1.msra.mxu0 0.0
    %138 = vmatprep.subr.mxu0 0.0
    %139 = vmatpush1.msra.mxu0 0.0
    %140 = vmatprep.subr.mxu0 0.0
    %141 = vmatpush1.msra.mxu0 0.0
    %142 = vmatprep.subr.mxu0 0.0
    %143 = vmatpush1.msra.mxu0 0.0
    %144 = vmatprep.subr.mxu0 0.0
    %145 = vmatpush1.msra.mxu0 0.0
    %146 = vmatprep.subr.mxu0 0.0
    %147 = vmatpush1.msra.mxu0 0.0
    %148 = vmatprep.subr.mxu0 0.0
    %149 = vmatpush1.msra.mxu0 0.0
    %150 = vmatprep.subr.mxu0 0.0
    %151 = vmatpush1.msra.mxu0 0.0
    %152 = vmatprep.subr.mxu0 0.0
    %153 = vmatpush1.msra.mxu0 0.0
    %154 = vmatprep.subr.mxu0 0.0
    %155 = vmatpush1.msra.mxu0 0.0
    %156 = vmatprep.subr.mxu0 0.0
    %157 = vmatpush1.msra.mxu0 0.0
    %158 = vmatprep.subr.mxu0 0.0
    %159 = vmatpush1.msra.mxu0 0.0
    %160 = vmatprep.subr.mxu0 0.0
    %161 = vmatpush1.msra.mxu0 0.0
    %162 = vmatprep.subr.mxu0 0.0
    %163 = vmatpush1.msra.mxu0 0.0
    %164 = vmatprep.subr.mxu0 0.0
    %165 = vmatpush1.msra.mxu0 0.0
    %166 = vmatprep.subr.mxu0 0.0
    %167 = vmatpush1.msra.mxu0 0.0
    %168 = vmatprep.subr.mxu0 0.0
    %169 = vmatpush1.msra.mxu0 0.0
    %170 = vmatprep.subr.mxu0 0.0
    %171 = vmatpush1.msra.mxu0 0.0
    %172 = vmatprep.mubr.f32.mxu0 0.0
    %173 = vmatmul.mubr.f32.gmra.mrb[0].mxu0 %v106
    %v174 = vpop.f32.mrb[0].mxu0
    %v175 = vadd.f32 0.0, %v174
    %v176 = vpop.f32.mrb[0].mxu0
    %177 = vdwg.mxu0
    %v178 = vsub.f32 0.0, %v175
    %v179 = vmul.f32 %v178, 1.442695
    %v180 = vpow.pop %v179
    %v181 = vadd.f32 %v180, 1.0
    %v182 = vrcp.pop %v181
    %v183 = vmul.f32 %v15, %v182
    %184 = vst [vmem:[#allocation2] sm:$0xf] %v183
    // Predicated region
    $region14: #{tpu_custom_call.1} parent=1 // pred_check
      _
    $region15: #{tpu_custom_call.1} parent=1 // pred_check_branch
      %186 = sbr.rel (0) target = $region17
    $region16: #{tpu_custom_call.1} parent=1 // pred_region
      %s188 = ssub.s32 64, 64
      %189 = vsyncadd [#allocation3], %s188
      %s191 = sshll.u32 [#allocation2], 4
      %s192 = int_to_ptr.vmem [resolvable:$true] %s191
      %194 = dma.vmem_to_hbm [thread:$0]  %s192, 64, %s3, [#allocation3]
    $region17: #{tpu_custom_call.1} parent=1 // pred_fallthru
      _
    // Predicated region
    $region18: #{tpu_custom_call.1} parent=1 // pred_check
      _
    $region19: #{tpu_custom_call.1} parent=1 // pred_check_branch
      %196 = sbr.rel (0) target = $region21
    $region20: #{tpu_custom_call.1} parent=1 // pred_region
      %197 = dma.done [#allocation3], 64
    $region21: #{tpu_custom_call.1} parent=1 // pred_fallthru
      _
    %198 = vsyncpa [#allocation3], 1

</llo_original>
